<compile_context>
chip_gen: v6e
topology: v6e:2x2x1
jax: 0.10.0
libtpu: 0.0.40
codegen_flags: <defaults>
</compile_context>

<pallas_src>
import math

import jax
import jax.numpy as jnp
from jax.experimental import pallas as pl
from jax.experimental.pallas import tpu as pltpu


def _round_up(a, b):
    return (a + b - 1) // b * b


def _vmem_capacity_bytes():
    """Per-core VMEM capacity; conservative fallback if the query fails."""
    try:
        info = pltpu.get_tpu_info()
        cap = int(getattr(info, "vmem_capacity_bytes"))
        if cap > 0:
            return cap
    except Exception:
        pass
    return 64 * 1024 * 1024  # v7x per-TC size; safe lower bound for v5e/v6e


# --------------------------------------------------------------------------
# Kernel 1: small vocab -> one-hot matmul on the MXU (exact row selection).
# --------------------------------------------------------------------------
def _embed_onehot_kernel(idx_ref, table_ref, out_ref):
    # idx_ref:   (T, 1)     int32  token ids for this tile (VMEM)
    # table_ref: (V_pad, D) table  VMEM-resident embedding table
    # out_ref:   (T, D)            gathered embedding rows
    T = out_ref.shape[0]
    V = table_ref.shape[0]

    idx = idx_ref[...]                                    # (T, 1)
    col = jax.lax.broadcasted_iota(jnp.int32, (T, V), 1)  # (T, V)
    onehot = (col == idx).astype(table_ref.dtype)         # exact 1.0 per row

    out_ref[...] = jnp.dot(
        onehot, table_ref[...], preferred_element_type=jnp.float32
    ).astype(out_ref.dtype)


# --------------------------------------------------------------------------
# Kernel 2: larger vocab -> row gather from the VMEM-resident table, token
# ids read as scalars from SMEM (scalar prefetch).  O(T*D) work per tile.
# --------------------------------------------------------------------------
def _embed_gather_kernel(idx_ref, table_ref, out_ref):
    # idx_ref:   (N_pad,) int32  SMEM (scalar-prefetched, clamped to [0, V-1])
    # table_ref: (V, D)          VMEM-resident embedding table
    # out_ref:   (T, D)          gathered embedding rows for this tile
    T = out_ref.shape[0]
    base = pl.program_id(0) * T

    def body(t, carry):
        tok = idx_ref[base + t]
        out_ref[pl.ds(t, 1), :] = table_ref[pl.ds(tok, 1), :]
        return carry

    jax.lax.fori_loop(0, T, body, 0)


# --------------------------------------------------------------------------
# Wrapper / factory
# --------------------------------------------------------------------------
def make_pre_embedding(
    pre_w2v,
    *,
    max_tile=2048,
    target_tile_bytes=1 << 20,   # ~1 MiB of output writeback per grid step
    onehot_vocab_limit=512,      # above this, one-hot O(V) work is wasteful
    vmem_fraction=0.75,          # leave headroom for Mosaic internal scratch
):
    """Returns a jitted fn x -> table[x] (PreEmbedding.forward)."""
    table = jnp.asarray(pre_w2v)
    assert table.ndim == 2, "embedding table must be (vocab, dim)"
    V, D = table.shape
    itemsize = jnp.dtype(table.dtype).itemsize

    capacity = _vmem_capacity_bytes()        # per-core (table duplicated on v7x)
    budget_cap = int(capacity * vmem_fraction)

    # ---- one-time table prep (hoisted out of the per-call path) ----
    use_onehot = _round_up(V, 128) <= onehot_vocab_limit
    if use_onehot and V % 128 != 0:
        # Lane-align the one-hot contraction dim; padded columns select 0 rows.
        Vk = _round_up(V, 128)
        table_p = jnp.zeros((Vk, D), table.dtype).at[:V, :].set(table)
    else:
        Vk = V
        table_p = table
    table_bytes = Vk * D * itemsize

    def _needed_bytes(T):
        # Resident table (double-buffered block with constant index_map: it is
        # DMA'd once, but two VMEM buffers are still allocated), output tiles,
        # index tiles, one-hot intermediates, plus headroom.
        b = 2 * table_bytes + 2 * T * D * itemsize + (2 << 20)
        if use_onehot:
            b += T * Vk * (4 + itemsize)   # (T, Vk) iota + (T, Vk) one-hot
            b += 2 * T * 4                 # (T, 1) int32 index tiles
        return b

    def _choose_tile(N):
        n8 = _round_up(max(N, 1), 8)
        T = max(8, _round_up(target_tile_bytes // max(D * itemsize, 1), 8))
        T = min(T, max_tile, n8)
        if n8 > 8:
            # Keep >= 2 grid steps so the "parallel" token axis can be split
            # across both TensorCores on v7x.
            T = min(T, _round_up(max(n8 // 2, 8), 8))
        while T > 8 and _needed_bytes(T) > budget_cap:
            T = max(8, _round_up(T // 2, 8))
        if _needed_bytes(T) > budget_cap:
            # TODO(synk): table not VMEM-resident -> pl.ANY table + multi-
            # outstanding make_async_copy row-DMA gather path.
            raise NotImplementedError(
                "embedding table too large for the VMEM-resident path")
        return T, _needed_bytes(T)

    def apply(x):
        lead_shape = x.shape
        N = math.prod(lead_shape)
        T, needed = _choose_tile(N)
        N_pad = _round_up(N, T)
        num_tiles = N_pad // T

        # Clamp (no in-kernel bounds checks) + pad with token 0; padded rows
        # are sliced off below.  All of this fuses under jit.
        idx = jnp.clip(x.reshape(N).astype(jnp.int32), 0, V - 1)
        if N_pad != N:
            idx = jnp.concatenate([idx, jnp.zeros((N_pad - N,), jnp.int32)])

        vmem_limit = int(min(int(capacity * 0.9),
                             max(needed + (4 << 20), 32 << 20)))
        cparams = pltpu.CompilerParams(
            dimension_semantics=("parallel",),   # shard token tiles over TCs
            vmem_limit_bytes=vmem_limit,
        )

        if use_onehot:
            out = pl.pallas_call(
                _embed_onehot_kernel,
                out_shape=jax.ShapeDtypeStruct((N_pad, D), table.dtype),
                grid_spec=pltpu.PrefetchScalarGridSpec(
                    num_scalar_prefetch=0,
                    grid=(num_tiles,),
                    in_specs=[
                        pl.BlockSpec((T, 1), lambda i: (i, 0)),
                        # Full table, constant index_map -> fetched once.
                        pl.BlockSpec((Vk, D), lambda i: (0, 0)),
                    ],
                    out_specs=pl.BlockSpec((T, D), lambda i: (i, 0)),
                ),
                compiler_params=cparams,
            )(idx.reshape(N_pad, 1), table_p)
        else:
            out = pl.pallas_call(
                _embed_gather_kernel,
                out_shape=jax.ShapeDtypeStruct((N_pad, D), table.dtype),
                grid_spec=pltpu.PrefetchScalarGridSpec(
                    num_scalar_prefetch=1,       # idx lands in SMEM
                    grid=(num_tiles,),
                    in_specs=[
                        pl.BlockSpec((Vk, D), lambda i, idx_ref: (0, 0)),
                    ],
                    out_specs=pl.BlockSpec((T, D), lambda i, idx_ref: (i, 0)),
                ),
                compiler_params=cparams,
            )(idx, table_p)

        if N_pad != N:
            out = out[:N]
        return out.reshape(*lead_shape, D)

    return jax.jit(apply)


if __name__ == "__main__":
    # Deterministic synthetic "pre_w2v" table and token indices (small demo
    # shapes consistent with the PyTorch module).
    vocab_size = 64
    ebd_dim = 128        # lane-aligned embedding width
    batch, seq = 2, 8

    key = jax.random.PRNGKey(0)
    k_tab, k_idx = jax.random.split(key)
    pre_w2v = jax.random.normal(k_tab, (vocab_size, ebd_dim), dtype=jnp.float32)
    x = jax.random.randint(k_idx, (batch, seq), 0, vocab_size, dtype=jnp.int32)

    embed = make_pre_embedding(pre_w2v)
    out = jax.block_until_ready(embed(x))

    # Sanity check against the pure-JAX reference (table[x]).
    ref = pre_w2v[x]
    assert out.shape == (batch, seq, ebd_dim)
    assert jnp.allclose(out, ref), "embedding gather mismatch"

    print("KERNEL_OK")
</pallas_src>

<mosaic_0001>
module attributes {stable_mosaic.version = 11 : i64} {
  func.func @_embed_onehot_kernel(%arg0: i32, %arg1: memref<8x1xi32, #tpu.memory_space<vmem>>, %arg2: memref<128x128xf32, #tpu.memory_space<vmem>>, %arg3: memref<8x128xf32, #tpu.memory_space<vmem>>) attributes {dimension_semantics = [#tpu.dimension_semantics<parallel>], iteration_bounds = array<i64: 2>, scalar_prefetch = 0 : i64, scratch_operands = 0 : i64, tpu.core_type = #tpu.core_type<tc>, window_params = [{transform_indices = @transform_0, window_bounds = array<i64: 8, 1>}, {pipeline_mode = #tpu.pipeline_mode<synchronous>, transform_indices = @transform_1, window_bounds = array<i64: 128, 128>}, {transform_indices = @transform_2, window_bounds = array<i64: 8, 128>}]} {
    %c0 = arith.constant 0 : index
    %c0_0 = arith.constant 0 : index
    %0 = vector.load %arg1[%c0, %c0_0] : memref<8x1xi32, #tpu.memory_space<vmem>>, vector<8x1xi32>
    %1 = tpu.iota {dimensions = array<i32: 1>} : vector<8x128xi32>
    %2 = vector.broadcast %0 : vector<8x1xi32> to vector<8x128xi32>
    %3 = arith.cmpi eq, %1, %2 : vector<8x128xi32>
    %4 = arith.extui %3 : vector<8x128xi1> to vector<8x128xi32>
    %5 = arith.sitofp %4 : vector<8x128xi32> to vector<8x128xf32>
    %c0_1 = arith.constant 0 : index
    %c0_2 = arith.constant 0 : index
    %6 = vector.load %arg2[%c0_1, %c0_2] : memref<128x128xf32, #tpu.memory_space<vmem>>, vector<128x128xf32>
    %cst = arith.constant dense<0.000000e+00> : vector<8x128xf32>
    %7 = tpu.matmul %5, %6, %cst {dimension_numbers = #tpu.dot_dimension_numbers<[1], [0], [0], [1], [0, 0, 1, 1], [], []>} : vector<8x128xf32>, vector<128x128xf32>, vector<8x128xf32> -> vector<8x128xf32>
    %c0_3 = arith.constant 0 : index
    %c0_4 = arith.constant 0 : index
    %8 = vector.load %arg3[%c0_3, %c0_4] : memref<8x128xf32, #tpu.memory_space<vmem>>, vector<8x128xf32>
    tpu.vector_store %arg3[%c0_3, %c0_4], %7 {strides = array<i32>} : memref<8x128xf32, #tpu.memory_space<vmem>>, vector<8x128xf32>,
    return
  }
  func.func @transform_0(%arg0: i32) -> (i32, i32) {
    %c0_i32 = arith.constant 0 : i32
    %c0_i32_0 = arith.constant 0 : i32
    return %arg0, %c0_i32 : i32, i32
  }
  func.func @transform_1(%arg0: i32) -> (i32, i32) {
    %c0_i32 = arith.constant 0 : i32
    %c0_i32_0 = arith.constant 0 : i32
    %c0_i32_1 = arith.constant 0 : i32
    return %c0_i32, %c0_i32_0 : i32, i32
  }
  func.func @transform_2(%arg0: i32) -> (i32, i32) {
    %c0_i32 = arith.constant 0 : i32
    %c0_i32_0 = arith.constant 0 : i32
    return %arg0, %c0_i32 : i32, i32
  }
}

</mosaic_0001>

<llo_original>
// kernel: apply.1
$region0: #{apply.1}
  #allocation0 [shape = 'u32[]', space=smem, size = 0x4, offset = 0x4, fixed_abs, tag = 'smem constant byte address 0x4 - core index']
  #allocation1 [shape = 'u32[144,128]{1,0:T(1,128)}', space=vmem, size = 0x12000, scoped, tag = 'internal scratch']
  %s0 = inlined_call_operand.vmem [shape: s32[16,1], index: 0, kind: input, shape index: {}]
  %s1 = inlined_call_operand.hbm [shape: f32[128,128], index: 1, kind: input, shape index: {}]
  %s2 = inlined_call_operand.hbm [shape: f32[16,128], index: 2, kind: output, shape index: {}]
  %s3 = sld [smem:[#allocation0]]
  $region45: #{apply.1} parent=0
    _
  %s5 = ssub.s32 1, %s3
  %s6 = scalar_select 0, %s5, %s3
  $region1: #{apply.1} parent=0
    #allocation2 [shape = 'u8[65536]{0}', space=vmem, size = 0x10000, scoped, tag = 'input window, operand 1, single buffered']
    #allocation3 [shape = 's32[2]{0}', space=sflag, size = 0x8, scoped, tag = 'scoped memory for apply.1']
    #allocation4 [shape = 's32[2]{0}', space=sflag, size = 0x8, scoped, tag = 'scoped memory for apply.1']
    #allocation5 [shape = 'u8[8192]{0}', space=vmem, size = 0x2000, scoped, tag = 'output window, operand 0']
    %7 = vsyncpa [#allocation3], 0
    %8 = vsyncpa [#allocation4], 0
    %s9 = scalar_lea.sflag [#allocation4], 1
    %10 = vsyncpa %s9, 0
    loop: start=0, step=1, limit=4
    $region2: #{apply.1} parent=1 // loop_pre_header
      _
    $region3: #{apply.1} parent=1 // loop_header
      %s12 = sphi 0, %s16
      %p13 = scmp.ge.s32.totalorder %s12, 4
      %s22 = sphi 0, %s24
      %s25 = sphi 0, %s22
      %s26 = sphi 0, %s25
      %s42 = sphi 0, %s26
      %s46 = sphi 0, %s46
      %s48 = sphi 0, %s46
      %s49 = sphi 0, %s48
      %s63 = sphi 0, %s49
      %s69 = sphi 0, %s71
      %s72 = sphi 0, %s69
      %s73 = sphi 0, %s72
      %s89 = sphi 0, %s73
    $region4: #{apply.1} parent=1 // loop_header_branch
      %15 = sbr.rel (%p13) target = $region8
    $region5: #{apply.1} parent=1 // loop_body
      %s17 = ssub.s32 %s12, 1
      %s18 = ssub.s32 %s12, 2
      %s19 = sadd.s32 %s12, 1
      %s20 = ssub.s32 %s12, %s19
      %p21 = scmp.eq.s32.totalorder %s20, 0
      %s23 = sadd.s32 %s22, 1
      %s24 = scalar_select %p21, %s22, %s23
      %p27 = pneg %p21
      %p28 = scmp.eq.s32.totalorder %s12, 1
      %p29 = por %p27, %p28
      %p30 = scmp.ne.s32.totalorder %s22, %s25
      %p31 = scmp.eq.s32.totalorder %s12, 0
      %p32 = por %p30, %p31
      %p33 = scmp.ne.s32.totalorder %s22, %s25
      %p34 = scmp.eq.s32.totalorder %s17, 1
      %p35 = por %p33, %p34
      %p36 = scmp.ne.s32.totalorder %s25, %s26
      %p37 = scmp.eq.s32.totalorder %s17, 0
      %p38 = por %p36, %p37
      %p39 = scmp.ne.s32.totalorder %s25, %s26
      %p40 = scmp.eq.s32.totalorder %s18, 1
      %p41 = por %p39, %p40
      %p43 = scmp.ne.s32.totalorder %s26, %s42
      %p44 = scmp.eq.s32.totalorder %s18, 0
      %p45 = por %p43, %p44
      %s47 = sadd.s32 %s46, 1
      %p50 = scmp.eq.s32.totalorder %s12, 1
      %p51 = scmp.ne.s32.totalorder %s46, %s48
      %p52 = scmp.eq.s32.totalorder %s12, 0
      %p53 = por %p51, %p52
      %p54 = scmp.ne.s32.totalorder %s46, %s48
      %p55 = scmp.eq.s32.totalorder %s17, 1
      %p56 = por %p54, %p55
      %p57 = scmp.ne.s32.totalorder %s48, %s49
      %p58 = scmp.eq.s32.totalorder %s17, 0
      %p59 = por %p57, %p58
      %p60 = scmp.ne.s32.totalorder %s48, %s49
      %p61 = scmp.eq.s32.totalorder %s18, 1
      %p62 = por %p60, %p61
      %p64 = scmp.ne.s32.totalorder %s49, %s63
      %p65 = scmp.eq.s32.totalorder %s18, 0
      %p66 = por %p64, %p65
      %s67 = ssub.s32 %s12, %s19
      %p68 = scmp.eq.s32.totalorder %s67, 0
      %s70 = sadd.s32 %s69, 1
      %s71 = scalar_select %p68, %s69, %s70
      %p74 = pneg %p68
      %p75 = scmp.eq.s32.totalorder %s12, 1
      %p76 = por %p74, %p75
      %p77 = scmp.ne.s32.totalorder %s69, %s72
      %p78 = scmp.eq.s32.totalorder %s12, 0
      %p79 = por %p77, %p78
      %p80 = scmp.ne.s32.totalorder %s69, %s72
      %p81 = scmp.eq.s32.totalorder %s17, 1
      %p82 = por %p80, %p81
      %p83 = scmp.ne.s32.totalorder %s72, %s73
      %p84 = scmp.eq.s32.totalorder %s17, 0
      %p85 = por %p83, %p84
      %p86 = scmp.ne.s32.totalorder %s72, %s73
      %p87 = scmp.eq.s32.totalorder %s18, 1
      %p88 = por %p86, %p87
      %p90 = scmp.ne.s32.totalorder %s73, %s89
      %p91 = scmp.eq.s32.totalorder %s18, 0
      %p92 = por %p90, %p91
      %p93 = scmp.le.s32.totalorder 1, %s12
      %p94 = scmp.lt.s32.totalorder %s12, 3
      %p95 = pnand %p93, %p94
      %p96 = pneg %p95
      // Predicated region
      $region9: #{apply.1} parent=5 // pred_check
        _
      $region10: #{apply.1} parent=5 // pred_check_branch
        %98 = sbr.rel (%p95) target = $region12
      $region11: #{apply.1} parent=5 // pred_region
        %s99 = ssub.s32 %s12, 1
        // Predicated region
        $region13: #{apply.1} parent=11 // pred_check
          %p100 = pneg %p59
        $region14: #{apply.1} parent=11 // pred_check_branch
          %102 = sbr.rel (%p100) target = $region16
        $region15: #{apply.1} parent=11 // pred_region
          %s104 = ssub.s32 2048, 2048
          %105 = vsyncadd [#allocation3], %s104
          %s106 = sshll.u32 [#allocation2], 4
          %s107 = int_to_ptr.vmem [resolvable:$true] %s106
          %112 = dma.hbm_to_vmem [thread:$0]  %s1, 2048, %s107, [#allocation3], 128, 128, 8
        $region16: #{apply.1} parent=11 // pred_fallthru
          _
      $region12: #{apply.1} parent=5 // pred_fallthru
        _
      %p113 = scmp.lt.s32.totalorder %s12, 2
      // Predicated region
      $region17: #{apply.1} parent=5 // pred_check
        %p114 = pneg %p113
      $region18: #{apply.1} parent=5 // pred_check_branch
        %116 = sbr.rel (%p114) target = $region20
      $region19: #{apply.1} parent=5 // pred_region
        // Predicated region
        $region21: #{apply.1} parent=19 // pred_check
          %p117 = pneg %p32
        $region22: #{apply.1} parent=19 // pred_check_branch
          %119 = sbr.rel (%p117) target = $region24
        $region23: #{apply.1} parent=19 // pred_region
          %p120 = scmp.lt.s32.totalorder %s12, 1
          %s121 = scalar_select %p120, %s12, 1
          %s122 = smul.addr %s121, 8
          %s123 = scalar_lea.vmem %s0, %s122
        $region24: #{apply.1} parent=19 // pred_fallthru
          _
      $region20: #{apply.1} parent=5 // pred_fallthru
        _
      %p124 = scmp.le.s32.totalorder 1, %s12
      %p125 = scmp.lt.s32.totalorder %s12, 3
      %p126 = pnand %p124, %p125
      %p127 = pneg %p126
      // Predicated region
      $region25: #{apply.1} parent=5 // pred_check
        _
      $region26: #{apply.1} parent=5 // pred_check_branch
        %129 = sbr.rel (%p126) target = $region28
      $region27: #{apply.1} parent=5 // pred_region
        %s130 = ssub.s32 %s12, 1
        // Predicated region
        $region29: #{apply.1} parent=27 // pred_check
          %p131 = pneg %p59
        $region30: #{apply.1} parent=27 // pred_check_branch
          %133 = sbr.rel (%p131) target = $region32
        $region31: #{apply.1} parent=27 // pred_region
          %134 = dma.done [#allocation3], 2048
        $region32: #{apply.1} parent=27 // pred_fallthru
          _
        %p135 = scmp.lt.s32.totalorder %s17, 1
        %s136 = scalar_select %p135, %s17, 1
        %s137 = smul.addr %s136, 8
        %s138 = scalar_lea.vmem %s0, %s137
        %p139 = pneg %p38
        %p140 = pneg %p35
        %p141 = pneg %p59
        %p142 = pneg %p56
        %p143 = pneg %p85
        %p144 = pneg %p82
        %s145 = sand.u32 %s72, 1
        %s146 = scalar_lea.sflag [#allocation4], %s145
        %s147 = sand.u32 %s72, 1
        %s148 = smul.addr %s147, 8
        %s149 = scalar_lea.vmem [#allocation5], %s148
        %p150 = scmp.lt.s32.totalorder %s17, 1
        %s151 = scalar_select %p150, %s17, 1
        %s152 = smul.addr %s151, 8
        %s153 = scalar_lea.vmem %s0, %s152
        %v154 = vld [vmem:[%s153] sm:$0xff]
        %v155 = vlaneseq
        %v156 = vand.u32 %v155, 127
        %157 = vset.pattern.permute.xlu0 0
        %158 = vperm.xlu0 %157, %v154
        %v159 = vpop.permute.xlu0 %158
        %vm160 = vcmp.eq.s32.totalorder %v156, %v159
        %v161 = vsel %vm160, 1, 0
        %v162 = vcvt.s32.f32 %v161
        %v163 = vld [vmem:[#allocation2] sm:$0xff]
        %v164 = vld [vmem:[#allocation2 + $0x8] sm:$0xff]
        %v165 = vld [vmem:[#allocation2 + $0x10] sm:$0xff]
        %v166 = vld [vmem:[#allocation2 + $0x18] sm:$0xff]
        %v167 = vld [vmem:[#allocation2 + $0x20] sm:$0xff]
        %v168 = vld [vmem:[#allocation2 + $0x28] sm:$0xff]
        %v169 = vld [vmem:[#allocation2 + $0x30] sm:$0xff]
        %v170 = vld [vmem:[#allocation2 + $0x38] sm:$0xff]
        %v171 = vld [vmem:[#allocation2 + $0x40] sm:$0xff]
        %v172 = vld [vmem:[#allocation2 + $0x48] sm:$0xff]
        %v173 = vld [vmem:[#allocation2 + $0x50] sm:$0xff]
        %v174 = vld [vmem:[#allocation2 + $0x58] sm:$0xff]
        %v175 = vld [vmem:[#allocation2 + $0x60] sm:$0xff]
        %v176 = vld [vmem:[#allocation2 + $0x68] sm:$0xff]
        %v177 = vld [vmem:[#allocation2 + $0x70] sm:$0xff]
        %v178 = vld [vmem:[#allocation2 + $0x78] sm:$0xff]
        %179 = vmatprep.subr.mxu0 0.0
        %180 = vmatpush1.msra.mxu0 %v178
        %181 = vmatprep.subr.mxu0 0.0
        %182 = vmatpush1.msra.mxu0 %v177
        %183 = vmatprep.subr.mxu0 0.0
        %184 = vmatpush1.msra.mxu0 %v176
        %185 = vmatprep.subr.mxu0 0.0
        %186 = vmatpush1.msra.mxu0 %v175
        %187 = vmatprep.subr.mxu0 0.0
        %188 = vmatpush1.msra.mxu0 %v174
        %189 = vmatprep.subr.mxu0 0.0
        %190 = vmatpush1.msra.mxu0 %v173
        %191 = vmatprep.subr.mxu0 0.0
        %192 = vmatpush1.msra.mxu0 %v172
        %193 = vmatprep.subr.mxu0 0.0
        %194 = vmatpush1.msra.mxu0 %v171
        %195 = vmatprep.subr.mxu0 0.0
        %196 = vmatpush1.msra.mxu0 %v170
        %197 = vmatprep.subr.mxu0 0.0
        %198 = vmatpush1.msra.mxu0 %v169
        %199 = vmatprep.subr.mxu0 0.0
        %200 = vmatpush1.msra.mxu0 %v168
        %201 = vmatprep.subr.mxu0 0.0
        %202 = vmatpush1.msra.mxu0 %v167
        %203 = vmatprep.subr.mxu0 0.0
        %204 = vmatpush1.msra.mxu0 %v166
        %205 = vmatprep.subr.mxu0 0.0
        %206 = vmatpush1.msra.mxu0 %v165
        %207 = vmatprep.subr.mxu0 0.0
        %208 = vmatpush1.msra.mxu0 %v164
        %209 = vmatprep.subr.mxu0 0.0
        %210 = vmatpush1.msra.mxu0 %v163
        %211 = vmatprep.subr.mxu0 0.0
        %212 = vmatpush2.msra.mxu0 0.0
        %213 = vmatprep.subr.mxu0 0.0
        %214 = vmatpush2.msra.mxu0 0.0
        %215 = vmatprep.subr.mxu0 0.0
        %216 = vmatpush2.msra.mxu0 0.0
        %217 = vmatprep.subr.mxu0 0.0
        %218 = vmatpush2.msra.mxu0 0.0
        %219 = vmatprep.subr.mxu0 0.0
        %220 = vmatpush2.msra.mxu0 0.0
        %221 = vmatprep.subr.mxu0 0.0
        %222 = vmatpush2.msra.mxu0 0.0
        %223 = vmatprep.subr.mxu0 0.0
        %224 = vmatpush2.msra.mxu0 0.0
        %225 = vmatprep.subr.mxu0 0.0
        %226 = vmatpush2.msra.mxu0 0.0
        %227 = vmatprep.subr.mxu0 0.0
        %228 = vmatpush2.msra.mxu0 0.0
        %229 = vmatprep.subr.mxu0 0.0
        %230 = vmatpush2.msra.mxu0 0.0
        %231 = vmatprep.subr.mxu0 0.0
        %232 = vmatpush2.msra.mxu0 0.0
        %233 = vmatprep.subr.mxu0 0.0
        %234 = vmatpush2.msra.mxu0 0.0
        %235 = vmatprep.subr.mxu0 0.0
        %236 = vmatpush2.msra.mxu0 0.0
        %237 = vmatprep.subr.mxu0 0.0
        %238 = vmatpush2.msra.mxu0 0.0
        %239 = vmatprep.subr.mxu0 0.0
        %240 = vmatpush2.msra.mxu0 0.0
        %241 = vmatprep.subr.mxu0 0.0
        %242 = vmatpush2.msra.mxu0 0.0
        %243 = vmatprep.mubr.f32.mxu0 0.0
        %244 = vmatmul.mubr.f32.gmra.mxu0 %v162
        %v245 = vpop.f32.mrf.mxu0
        %v246 = vadd.f32 0.0, %v245
        %v247 = vpop.f32.mrf.mxu0
        %248 = vdwg.mxu0
        %249 = vst [vmem:[%s149] sm:$0xff] %v246
        %s250 = sand.u32 %s72, 1
        %s251 = scalar_lea.sflag [#allocation4], %s250
        %s252 = sand.u32 %s72, 1
        %s253 = smul.addr %s252, 8
        %s254 = scalar_lea.vmem [#allocation5], %s253
        // Predicated region
        $region33: #{apply.1} parent=27 // pred_check
          %p255 = pneg %p82
        $region34: #{apply.1} parent=27 // pred_check_branch
          %257 = sbr.rel (%p255) target = $region36
        $region35: #{apply.1} parent=27 // pred_region
          %s259 = ssub.s32 128, 128
          %260 = vsyncadd %s251, %s259
          %s261 = smul.addr %s17, 128
          %s262 = scalar_lea.hbm %s2, %s261
          %s264 = sshll.u32 %s254, 4
          %s265 = int_to_ptr.vmem [resolvable:$true] %s264
          %267 = dma.vmem_to_hbm [thread:$0]  %s265, 128, %s262, %s251
        $region36: #{apply.1} parent=27 // pred_fallthru
          _
      $region28: #{apply.1} parent=5 // pred_fallthru
        _
      %p268 = scmp.le.s32.totalorder 2, %s12
      // Predicated region
      $region37: #{apply.1} parent=5 // pred_check
        %p269 = pneg %p268
      $region38: #{apply.1} parent=5 // pred_check_branch
        %271 = sbr.rel (%p269) target = $region40
      $region39: #{apply.1} parent=5 // pred_region
        %s272 = ssub.s32 %s12, 2
        // Predicated region
        $region41: #{apply.1} parent=39 // pred_check
          %p273 = pneg %p88
        $region42: #{apply.1} parent=39 // pred_check_branch
          %275 = sbr.rel (%p273) target = $region44
        $region43: #{apply.1} parent=39 // pred_region
          %s276 = sand.u32 %s73, 1
          %s277 = scalar_lea.sflag [#allocation4], %s276
          %s278 = sand.u32 %s73, 1
          %s279 = smul.addr %s278, 8
          %s280 = scalar_lea.vmem [#allocation5], %s279
          %281 = dma.done %s277, 128
        $region44: #{apply.1} parent=39 // pred_fallthru
          _
      $region40: #{apply.1} parent=5 // pred_fallthru
        _
    $region6: #{apply.1} parent=1 // loop_footer
      %s16 = sadd.s32 1, %s12
    $region7: #{apply.1} parent=1 // loop_footer_branch
      %11 = sbr.rel target = $region3
    $region8: #{apply.1} parent=1 // loop_exit
      _
    %282 = vsyncpa [#allocation3], 1
    %s283 = scalar_lea.sflag [#allocation3], 1
    %284 = vsyncpa %s283, 1
    %285 = vsyncpa [#allocation4], 1
    %s286 = scalar_lea.sflag [#allocation4], 1
    %287 = vsyncpa %s286, 1

</llo_original>
